<compile_context>
chip_gen: v6e
topology: v6e:2x2x1
jax: 0.10.0
libtpu: 0.0.40
codegen_flags: <defaults>
</compile_context>

<pallas_src>
import functools

import jax
import jax.numpy as jnp
from jax import lax
from jax.experimental import pallas as pl
from jax.experimental.pallas import tpu as pltpu

GAMMA = 1.0          # module default
NUM_CLASSES = 80     # module default; detection head uses C = num_classes + 1
_TILE_N_MAX = 2048   # rows per grid step (~1 MiB f32 block at C_pad=128)


def _round_up(x, m):
    return (x + m - 1) // m * m


def _cdiv(a, b):
    return (a + b - 1) // b


def _focal_loss_kernel(x_ref, t_ref, out_ref, *, gamma, tile_n, num_blocks,
                       n_last_valid, need_mask):
    # x_ref: (tile_n, C) logits in VMEM, t_ref: (tile_n, 1) int32 targets.
    x = x_ref[...].astype(jnp.float32)        # f32 math (v5e: no bf16 VPU/EUP)
    t = t_ref[...]

    # Numerically stable log-sum-exp.
    m = jnp.max(x, axis=-1, keepdims=True)                        # (tile_n, 1)
    e = jnp.exp(x - m)                                            # (tile_n, C)
    s = jnp.sum(e, axis=-1, keepdims=True)                        # (tile_n, 1)

    # Single one-hot pass: gather the target logit (no dynamic gather on TPU).
    col = lax.broadcasted_iota(jnp.int32, x.shape, 1)             # (tile_n, C)
    tgt_logit = jnp.sum(jnp.where(col == t, x, 0.0), axis=-1, keepdims=True)

    ce = jnp.maximum((jnp.log(s) + m) - tgt_logit, 0.0)           # CE >= 0
    p = jnp.exp(-ce)                                              # in (0, 1]
    one_minus_p = 1.0 - p

    # Trace-time gamma specialization: avoid exp(gamma*log(.)) on the EUP.
    if gamma == 0.0:
        mod = jnp.ones_like(one_minus_p)
    elif gamma == 1.0:
        mod = one_minus_p
    elif gamma == 2.0:
        mod = one_minus_p * one_minus_p
    else:
        mod = jnp.power(one_minus_p, gamma)
    loss = mod * ce                                               # (tile_n, 1)

    def _store(v):
        # Lane-dense per-block partial sum: one unmasked (1, 128) store.
        out_ref[...] = jnp.broadcast_to(jnp.sum(v), (1, 128))

    if need_mask:
        i = pl.program_id(0)

        @pl.when(i != num_blocks - 1)
        def _():
            _store(loss)

        @pl.when(i == num_blocks - 1)
        def _():
            # Only the ragged last block pays for the row mask.  Keep this a
            # select (not multiply-by-mask) so NaN/Inf from undefined padded
            # rows cannot leak into the block sum.
            row_ids = lax.broadcasted_iota(jnp.int32, (tile_n, 1), 0)
            _store(jnp.where(row_ids < n_last_valid, loss, 0.0))
    else:
        _store(loss)


def focal_loss(logits, target, *, gamma=GAMMA, tile_n_max=_TILE_N_MAX):
    """logits: (N, C) float, target: (N,) int -> scalar float32 focal loss sum."""
    n, c = logits.shape
    c_lane = _round_up(c, 128)   # lane-padded VMEM footprint of a row (budgeting only)

    # Rows per grid step: big enough to amortize per-step overhead, small
    # enough that (a) double-buffered inputs + intermediates fit v7x's 64 MiB
    # VMEM and (b) both v7x TensorCores get >= 2 blocks ("parallel" axis).
    tile_n_max = max(8, (tile_n_max // 8) * 8)
    per_buf_budget = 4 << 20
    rows_by_vmem = max(8, ((per_buf_budget // (c_lane * 4)) // 8) * 8)
    tile_n = min(tile_n_max, rows_by_vmem)
    tile_n = min(tile_n, max(8, _round_up(_cdiv(n, 4), 8)))
    if tile_n >= n:
        tile_n = n               # single full-extent block (legal for any n)
    num_blocks = _cdiv(n, tile_n)
    need_mask = (n % tile_n) != 0

    # No padding of the logits tensor: class dim stays at C and the ragged
    # last row block is masked in-kernel -> logits cross HBM exactly once.
    t = target.astype(jnp.int32).reshape(n, 1)

    in_bytes = jnp.dtype(logits.dtype).itemsize
    block_logits = tile_n * c_lane * in_bytes   # lane-padded input buffer
    block_tgt = tile_n * 128 * 4                # (tile_n,1) i32 lane-pads to 128
    interm = 4 * tile_n * c_lane * 4            # f32 copy, e, iota/onehot, temps
    vmem_limit = int(2 * (block_logits + block_tgt) + interm + (2 << 20))
    vmem_limit = max(vmem_limit, 4 << 20)

    kernel = functools.partial(
        _focal_loss_kernel,
        gamma=float(gamma),
        tile_n=tile_n,
        num_blocks=num_blocks,
        n_last_valid=n - (num_blocks - 1) * tile_n,
        need_mask=need_mask,
    )

    partials = pl.pallas_call(
        kernel,
        out_shape=jax.ShapeDtypeStruct((1, num_blocks * 128), jnp.float32),
        grid=(num_blocks,),
        in_specs=[
            pl.BlockSpec((tile_n, c), lambda i: (i, 0)),
            pl.BlockSpec((tile_n, 1), lambda i: (i, 0)),
        ],
        out_specs=pl.BlockSpec((1, 128), lambda i: (0, i)),
        compiler_params=pltpu.CompilerParams(
            dimension_semantics=("parallel",),
            vmem_limit_bytes=vmem_limit,
        ),
    )(logits, t)

    # Each block broadcast its partial sum into its own 128-lane slab.
    return jnp.sum(partials.reshape(num_blocks, 128)[:, 0])


def _focal_loss_ref(logits, target, gamma=GAMMA):
    # pure-JAX reference (mirrors F.cross_entropy + focal modulation)
    logp = jax.nn.log_softmax(logits.astype(jnp.float32), axis=-1)
    ce = -jnp.take_along_axis(logp, target[:, None].astype(jnp.int32), axis=-1)[:, 0]
    p = jnp.exp(-ce)
    return jnp.sum((1.0 - p) ** gamma * ce)


if __name__ == "__main__":
    key = jax.random.PRNGKey(0)
    k1, k2, k3, k4 = jax.random.split(key, 4)

    C = NUM_CLASSES + 1          # fast_rcnn classification head: classes + background

    # Case 1: tiny ROI batch.
    N1 = 16
    logits1 = jax.random.normal(k1, (N1, C), dtype=jnp.float32)
    target1 = jax.random.randint(k2, (N1,), 0, C, dtype=jnp.int32)
    loss1 = focal_loss(logits1, target1)
    jax.block_until_ready(loss1)
    ref1 = _focal_loss_ref(logits1, target1)
    assert jnp.allclose(loss1, ref1, rtol=1e-4, atol=1e-4), (loss1, ref1)

    # Case 2: multi-block grid with a ragged, in-kernel-masked last block.
    N2 = 300
    logits2 = jax.random.normal(k3, (N2, C), dtype=jnp.float32)
    target2 = jax.random.randint(k4, (N2,), 0, C, dtype=jnp.int32)
    loss2 = focal_loss(logits2, target2, tile_n_max=128)
    jax.block_until_ready(loss2)
    ref2 = _focal_loss_ref(logits2, target2)
    assert jnp.allclose(loss2, ref2, rtol=1e-4, atol=1e-4), (loss2, ref2)

    # Case 3: non-default gamma (specialized square path).
    loss3 = focal_loss(logits2, target2, gamma=2.0)
    jax.block_until_ready(loss3)
    ref3 = _focal_loss_ref(logits2, target2, gamma=2.0)
    assert jnp.allclose(loss3, ref3, rtol=1e-4, atol=1e-4), (loss3, ref3)

    print("KERNEL_OK")
</pallas_src>

<mosaic_0001>
module attributes {stable_mosaic.version = 11 : i64} {
  func.func @_focal_loss_kernel(%arg0: i32, %arg1: memref<8x81xf32, #tpu.memory_space<vmem>>, %arg2: memref<8x1xi32, #tpu.memory_space<vmem>>, %arg3: memref<1x128xf32, #tpu.memory_space<vmem>>) attributes {dimension_semantics = [#tpu.dimension_semantics<parallel>], iteration_bounds = array<i64: 2>, scalar_prefetch = 0 : i64, scratch_operands = 0 : i64, tpu.core_type = #tpu.core_type<tc>, window_params = [{transform_indices = @transform_0, window_bounds = array<i64: 8, 81>}, {transform_indices = @transform_1, window_bounds = array<i64: 8, 1>}, {transform_indices = @transform_2, window_bounds = array<i64: 1, 128>}]} {
    %c0 = arith.constant 0 : index
    %c0_0 = arith.constant 0 : index
    %0 = vector.load %arg1[%c0, %c0_0] : memref<8x81xf32, #tpu.memory_space<vmem>>, vector<8x81xf32>
    %c0_1 = arith.constant 0 : index
    %c0_2 = arith.constant 0 : index
    %1 = vector.load %arg2[%c0_1, %c0_2] : memref<8x1xi32, #tpu.memory_space<vmem>>, vector<8x1xi32>
    %cst = arith.constant dense<0xFF800000> : vector<8xf32>
    %2 = vector.multi_reduction <maximumf>, %0, %cst [1] : vector<8x81xf32> to vector<8xf32>
    %3 = vector.shape_cast %2 : vector<8xf32> to vector<8x1xf32>
    %4 = vector.broadcast %3 : vector<8x1xf32> to vector<8x81xf32>
    %5 = arith.subf %0, %4 : vector<8x81xf32>
    %6 = math.exp %5 : vector<8x81xf32>
    %cst_3 = arith.constant dense<0.000000e+00> : vector<8xf32>
    %7 = vector.multi_reduction <add>, %6, %cst_3 [1] : vector<8x81xf32> to vector<8xf32>
    %8 = vector.shape_cast %7 : vector<8xf32> to vector<8x1xf32>
    %9 = tpu.iota {dimensions = array<i32: 1>} : vector<8x81xi32>
    %10 = vector.broadcast %1 : vector<8x1xi32> to vector<8x81xi32>
    %11 = arith.cmpi eq, %9, %10 : vector<8x81xi32>
    %cst_4 = arith.constant 0.000000e+00 : f32
    %12 = vector.broadcast %cst_4 : f32 to vector<8x81xf32>
    %13 = arith.select %11, %0, %12 : vector<8x81xi1>, vector<8x81xf32>
    %cst_5 = arith.constant dense<0.000000e+00> : vector<8xf32>
    %14 = vector.multi_reduction <add>, %13, %cst_5 [1] : vector<8x81xf32> to vector<8xf32>
    %15 = vector.shape_cast %14 : vector<8xf32> to vector<8x1xf32>
    %16 = math.log %8 : vector<8x1xf32>
    %17 = arith.addf %16, %3 : vector<8x1xf32>
    %18 = arith.subf %17, %15 : vector<8x1xf32>
    %cst_6 = arith.constant 0.000000e+00 : f32
    %19 = vector.broadcast %cst_6 : f32 to vector<8x1xf32>
    %20 = arith.maximumf %18, %19 : vector<8x1xf32>
    %cst_7 = arith.constant 0.000000e+00 : f32
    %21 = vector.broadcast %cst_7 : f32 to vector<8x1xf32>
    %22 = arith.subf %21, %20 : vector<8x1xf32>
    %23 = math.exp %22 : vector<8x1xf32>
    %cst_8 = arith.constant 1.000000e+00 : f32
    %24 = vector.broadcast %cst_8 : f32 to vector<8x1xf32>
    %25 = arith.subf %24, %23 : vector<8x1xf32>
    %26 = arith.mulf %25, %20 : vector<8x1xf32>
    %27 = vector.shape_cast %26 : vector<8x1xf32> to vector<1x8x1xf32>
    %cst_9 = arith.constant dense<0.000000e+00> : vector<1xf32>
    %28 = vector.multi_reduction <add>, %27, %cst_9 [1, 2] : vector<1x8x1xf32> to vector<1xf32>
    %29 = vector.shape_cast %28 : vector<1xf32> to vector<1x1x1xf32>
    %30 = vector.extract %29[0, 0, 0] : f32 from vector<1x1x1xf32>
    %31 = vector.broadcast %30 : f32 to vector<1x128xf32>
    %c0_10 = arith.constant 0 : index
    %c0_11 = arith.constant 0 : index
    %32 = vector.load %arg3[%c0_10, %c0_11] : memref<1x128xf32, #tpu.memory_space<vmem>>, vector<1x128xf32>
    tpu.vector_store %arg3[%c0_10, %c0_11], %31 {strides = array<i32>} : memref<1x128xf32, #tpu.memory_space<vmem>>, vector<1x128xf32>,
    return
  }
  func.func @transform_0(%arg0: i32) -> (i32, i32) {
    %c0_i32 = arith.constant 0 : i32
    %c0_i32_0 = arith.constant 0 : i32
    return %arg0, %c0_i32 : i32, i32
  }
  func.func @transform_1(%arg0: i32) -> (i32, i32) {
    %c0_i32 = arith.constant 0 : i32
    %c0_i32_0 = arith.constant 0 : i32
    return %arg0, %c0_i32 : i32, i32
  }
  func.func @transform_2(%arg0: i32) -> (i32, i32) {
    %c0_i32 = arith.constant 0 : i32
    %c0_i32_0 = arith.constant 0 : i32
    return %c0_i32, %arg0 : i32, i32
  }
}

</mosaic_0001>

<llo_original>
// kernel: tpu_custom_call.1
$region0: #{tpu_custom_call.1}
  #allocation0 [shape = 'u32[]', space=smem, size = 0x4, offset = 0x4, fixed_abs, tag = 'smem constant byte address 0x4 - core index']
  #allocation1 [shape = 'u32[144,128]{1,0:T(1,128)}', space=vmem, size = 0x12000, scoped, tag = 'internal scratch']
  %s0 = inlined_call_operand.vmem [shape: f32[16,81], index: 0, kind: input, shape index: {}]
  %s1 = inlined_call_operand.vmem [shape: s32[16,1], index: 1, kind: input, shape index: {}]
  %s2 = inlined_call_operand.hbm [shape: f32[1,256], index: 2, kind: output, shape index: {}]
  %s3 = sld [smem:[#allocation0]]
  $region41: #{tpu_custom_call.1} parent=0
    _
  %s5 = ssub.s32 1, %s3
  %s6 = scalar_select 0, %s5, %s3
  $region1: #{tpu_custom_call.1} parent=0
    #allocation2 [shape = 'u8[1024]{0}', space=vmem, size = 0x400, scoped, tag = 'output window, operand 0']
    #allocation3 [shape = 's32[2]{0}', space=sflag, size = 0x8, scoped, tag = 'scoped memory for tpu_custom_call.1']
    %7 = vsyncpa [#allocation3], 0
    %s8 = scalar_lea.sflag [#allocation3], 1
    %9 = vsyncpa %s8, 0
    loop: start=0, step=1, limit=4
    $region2: #{tpu_custom_call.1} parent=1 // loop_pre_header
      _
    $region3: #{tpu_custom_call.1} parent=1 // loop_header
      %s11 = sphi 0, %s15
      %p12 = scmp.ge.s32.totalorder %s11, 4
      %s21 = sphi 0, %s23
      %s24 = sphi 0, %s21
      %s25 = sphi 0, %s24
      %s41 = sphi 0, %s25
      %s47 = sphi 0, %s49
      %s50 = sphi 0, %s47
      %s51 = sphi 0, %s50
      %s67 = sphi 0, %s51
      %s73 = sphi 0, %s75
      %s76 = sphi 0, %s73
      %s77 = sphi 0, %s76
      %s93 = sphi 0, %s77
    $region4: #{tpu_custom_call.1} parent=1 // loop_header_branch
      %14 = sbr.rel (%p12) target = $region8
    $region5: #{tpu_custom_call.1} parent=1 // loop_body
      %s16 = ssub.s32 %s11, 1
      %s17 = ssub.s32 %s11, 2
      %s18 = sadd.s32 %s11, 1
      %s19 = ssub.s32 %s11, %s18
      %p20 = scmp.eq.s32.totalorder %s19, 0
      %s22 = sadd.s32 %s21, 1
      %s23 = scalar_select %p20, %s21, %s22
      %p26 = pneg %p20
      %p27 = scmp.eq.s32.totalorder %s11, 1
      %p28 = por %p26, %p27
      %p29 = scmp.ne.s32.totalorder %s21, %s24
      %p30 = scmp.eq.s32.totalorder %s11, 0
      %p31 = por %p29, %p30
      %p32 = scmp.ne.s32.totalorder %s21, %s24
      %p33 = scmp.eq.s32.totalorder %s16, 1
      %p34 = por %p32, %p33
      %p35 = scmp.ne.s32.totalorder %s24, %s25
      %p36 = scmp.eq.s32.totalorder %s16, 0
      %p37 = por %p35, %p36
      %p38 = scmp.ne.s32.totalorder %s24, %s25
      %p39 = scmp.eq.s32.totalorder %s17, 1
      %p40 = por %p38, %p39
      %p42 = scmp.ne.s32.totalorder %s25, %s41
      %p43 = scmp.eq.s32.totalorder %s17, 0
      %p44 = por %p42, %p43
      %s45 = ssub.s32 %s11, %s18
      %p46 = scmp.eq.s32.totalorder %s45, 0
      %s48 = sadd.s32 %s47, 1
      %s49 = scalar_select %p46, %s47, %s48
      %p52 = pneg %p46
      %p53 = scmp.eq.s32.totalorder %s11, 1
      %p54 = por %p52, %p53
      %p55 = scmp.ne.s32.totalorder %s47, %s50
      %p56 = scmp.eq.s32.totalorder %s11, 0
      %p57 = por %p55, %p56
      %p58 = scmp.ne.s32.totalorder %s47, %s50
      %p59 = scmp.eq.s32.totalorder %s16, 1
      %p60 = por %p58, %p59
      %p61 = scmp.ne.s32.totalorder %s50, %s51
      %p62 = scmp.eq.s32.totalorder %s16, 0
      %p63 = por %p61, %p62
      %p64 = scmp.ne.s32.totalorder %s50, %s51
      %p65 = scmp.eq.s32.totalorder %s17, 1
      %p66 = por %p64, %p65
      %p68 = scmp.ne.s32.totalorder %s51, %s67
      %p69 = scmp.eq.s32.totalorder %s17, 0
      %p70 = por %p68, %p69
      %s71 = ssub.s32 %s11, %s18
      %p72 = scmp.eq.s32.totalorder %s71, 0
      %s74 = sadd.s32 %s73, 1
      %s75 = scalar_select %p72, %s73, %s74
      %p78 = pneg %p72
      %p79 = scmp.eq.s32.totalorder %s11, 1
      %p80 = por %p78, %p79
      %p81 = scmp.ne.s32.totalorder %s73, %s76
      %p82 = scmp.eq.s32.totalorder %s11, 0
      %p83 = por %p81, %p82
      %p84 = scmp.ne.s32.totalorder %s73, %s76
      %p85 = scmp.eq.s32.totalorder %s16, 1
      %p86 = por %p84, %p85
      %p87 = scmp.ne.s32.totalorder %s76, %s77
      %p88 = scmp.eq.s32.totalorder %s16, 0
      %p89 = por %p87, %p88
      %p90 = scmp.ne.s32.totalorder %s76, %s77
      %p91 = scmp.eq.s32.totalorder %s17, 1
      %p92 = por %p90, %p91
      %p94 = scmp.ne.s32.totalorder %s77, %s93
      %p95 = scmp.eq.s32.totalorder %s17, 0
      %p96 = por %p94, %p95
      %p97 = scmp.le.s32.totalorder 1, %s11
      %p98 = scmp.lt.s32.totalorder %s11, 3
      %p99 = pnand %p97, %p98
      %p100 = pneg %p99
      // Predicated region
      $region9: #{tpu_custom_call.1} parent=5 // pred_check
        _
      $region10: #{tpu_custom_call.1} parent=5 // pred_check_branch
        %102 = sbr.rel (%p99) target = $region12
      $region11: #{tpu_custom_call.1} parent=5 // pred_region
        %s103 = ssub.s32 %s11, 1
      $region12: #{tpu_custom_call.1} parent=5 // pred_fallthru
        _
      %p104 = scmp.lt.s32.totalorder %s11, 2
      // Predicated region
      $region13: #{tpu_custom_call.1} parent=5 // pred_check
        %p105 = pneg %p104
      $region14: #{tpu_custom_call.1} parent=5 // pred_check_branch
        %107 = sbr.rel (%p105) target = $region16
      $region15: #{tpu_custom_call.1} parent=5 // pred_region
        // Predicated region
        $region17: #{tpu_custom_call.1} parent=15 // pred_check
          %p108 = pneg %p31
        $region18: #{tpu_custom_call.1} parent=15 // pred_check_branch
          %110 = sbr.rel (%p108) target = $region20
        $region19: #{tpu_custom_call.1} parent=15 // pred_region
          %p111 = scmp.lt.s32.totalorder %s11, 1
          %s112 = scalar_select %p111, %s11, 1
          %s113 = smul.addr %s112, 8
          %s114 = scalar_lea.vmem %s0, %s113
        $region20: #{tpu_custom_call.1} parent=15 // pred_fallthru
          _
        // Predicated region
        $region21: #{tpu_custom_call.1} parent=15 // pred_check
          %p115 = pneg %p57
        $region22: #{tpu_custom_call.1} parent=15 // pred_check_branch
          %117 = sbr.rel (%p115) target = $region24
        $region23: #{tpu_custom_call.1} parent=15 // pred_region
          %p118 = scmp.lt.s32.totalorder %s11, 1
          %s119 = scalar_select %p118, %s11, 1
          %s120 = smul.addr %s119, 8
          %s121 = scalar_lea.vmem %s1, %s120
        $region24: #{tpu_custom_call.1} parent=15 // pred_fallthru
          _
      $region16: #{tpu_custom_call.1} parent=5 // pred_fallthru
        _
      %p122 = scmp.le.s32.totalorder 1, %s11
      %p123 = scmp.lt.s32.totalorder %s11, 3
      %p124 = pnand %p122, %p123
      %p125 = pneg %p124
      // Predicated region
      $region25: #{tpu_custom_call.1} parent=5 // pred_check
        _
      $region26: #{tpu_custom_call.1} parent=5 // pred_check_branch
        %127 = sbr.rel (%p124) target = $region28
      $region27: #{tpu_custom_call.1} parent=5 // pred_region
        %s128 = ssub.s32 %s11, 1
        %p129 = scmp.lt.s32.totalorder %s16, 1
        %s130 = scalar_select %p129, %s16, 1
        %s131 = smul.addr %s130, 8
        %s132 = scalar_lea.vmem %s0, %s131
        %p133 = pneg %p37
        %p134 = pneg %p34
        %p135 = scmp.lt.s32.totalorder %s16, 1
        %s136 = scalar_select %p135, %s16, 1
        %s137 = smul.addr %s136, 8
        %s138 = scalar_lea.vmem %s1, %s137
        %p139 = pneg %p63
        %p140 = pneg %p60
        %p141 = pneg %p89
        %p142 = pneg %p86
        %s143 = sand.u32 %s76, 1
        %s144 = scalar_lea.sflag [#allocation3], %s143
        %s145 = sand.u32 %s76, 1
        %s146 = scalar_lea.vmem [#allocation2], %s145
        %p147 = scmp.lt.s32.totalorder %s16, 1
        %s148 = scalar_select %p147, %s16, 1
        %s149 = smul.addr %s148, 8
        %s150 = scalar_lea.vmem %s0, %s149
        %p151 = scmp.lt.s32.totalorder %s16, 1
        %s152 = scalar_select %p151, %s16, 1
        %s153 = smul.addr %s152, 8
        %s154 = scalar_lea.vmem %s1, %s153
        %v155 = vld [vmem:[%s150] sm:$0xff]
        %v156 = vld [vmem:[%s154] sm:$0xff]
        %vm157 = vcmask 662528
        %v158 = vsel %vm157, %v155, -inf
        %159 = vmax.xlane.f32.xlu0 %v158
        %v160 = vpop.xlane.xlu0 %159
        %v161 = vsub.f32 %v155, %v160
        %v162 = vmul.f32 %v161, 1.442695
        %v163 = vpow.pop %v162
        %v164 = vsel %vm157, %v163, 0.0
        %165 = vadd.xlane.f32.xlu0 %v164
        %v166 = vpop.xlane.xlu0 %165
        %v167 = vlaneseq
        %v168 = vand.u32 %v167, 127
        %169 = vset.pattern.permute.xlu0 0
        %170 = vperm.xlu0 %169, %v156
        %v171 = vpop.permute.xlu0 %170
        %vm172 = vcmp.eq.s32.totalorder %v168, %v171
        %v173 = vsel %vm172, %v155, 0.0
        %v174 = vsel %vm157, %v173, 0.0
        %175 = vadd.xlane.f32.xlu0 %v174
        %v176 = vpop.xlane.xlu0 %175
        %v177 = vlog2.pop %v166
        %v178 = vmul.f32 %v177, 0.6931472
        %v179 = vadd.f32 %v178, %v160
        %v180 = vsub.f32 %v179, %v176
        %v181 = vmax.f32 %v180, 0.0
        %v182 = vsub.f32 0.0, %v181
        %v183 = vmul.f32 %v182, 1.442695
        %v184 = vpow.pop %v183
        %v185 = vsub.f32 1.0, %v184
        %v186 = vmul.f32 %v185, %v181
        %vm187 = vcmask 7168
        %v188 = vsel %vm187, %v186, 0.0
        %189 = vadd.xlane.f32.xlu0 %v188
        %v190 = vpop.xlane.xlu0 %189
        %v191 = vrot.slane %v190, 4
        %v192 = vadd.f32 %v190, %v191
        %v193 = vrot.slane %v192, 2
        %v194 = vadd.f32 %v192, %v193
        %v195 = vrot.slane %v194, 1
        %v196 = vadd.f32 %v194, %v195
        %s197 = vtos %v196
        %v198 = vstv %s197
        %199 = vst [vmem:[%s146] sm:$0x1] %v198
        %s200 = sand.u32 %s76, 1
        %s201 = scalar_lea.sflag [#allocation3], %s200
        %s202 = sand.u32 %s76, 1
        %s203 = scalar_lea.vmem [#allocation2], %s202
        // Predicated region
        $region29: #{tpu_custom_call.1} parent=27 // pred_check
          %p204 = pneg %p86
        $region30: #{tpu_custom_call.1} parent=27 // pred_check_branch
          %206 = sbr.rel (%p204) target = $region32
        $region31: #{tpu_custom_call.1} parent=27 // pred_region
          %s208 = ssub.s32 16, 16
          %209 = vsyncadd %s201, %s208
          %s210 = smul.addr %s16, 16
          %s211 = scalar_lea.hbm %s2, %s210
          %s213 = sshll.u32 %s203, 4
          %s214 = int_to_ptr.vmem [resolvable:$true] %s213
          %216 = dma.vmem_to_hbm [thread:$0]  %s214, 16, %s211, %s201
        $region32: #{tpu_custom_call.1} parent=27 // pred_fallthru
          _
      $region28: #{tpu_custom_call.1} parent=5 // pred_fallthru
        _
      %p217 = scmp.le.s32.totalorder 2, %s11
      // Predicated region
      $region33: #{tpu_custom_call.1} parent=5 // pred_check
        %p218 = pneg %p217
      $region34: #{tpu_custom_call.1} parent=5 // pred_check_branch
        %220 = sbr.rel (%p218) target = $region36
      $region35: #{tpu_custom_call.1} parent=5 // pred_region
        %s221 = ssub.s32 %s11, 2
        // Predicated region
        $region37: #{tpu_custom_call.1} parent=35 // pred_check
          %p222 = pneg %p92
        $region38: #{tpu_custom_call.1} parent=35 // pred_check_branch
          %224 = sbr.rel (%p222) target = $region40
        $region39: #{tpu_custom_call.1} parent=35 // pred_region
          %s225 = sand.u32 %s77, 1
          %s226 = scalar_lea.sflag [#allocation3], %s225
          %s227 = sand.u32 %s77, 1
          %s228 = scalar_lea.vmem [#allocation2], %s227
          %229 = dma.done %s226, 16
        $region40: #{tpu_custom_call.1} parent=35 // pred_fallthru
          _
      $region36: #{tpu_custom_call.1} parent=5 // pred_fallthru
        _
    $region6: #{tpu_custom_call.1} parent=1 // loop_footer
      %s15 = sadd.s32 1, %s11
    $region7: #{tpu_custom_call.1} parent=1 // loop_footer_branch
      %10 = sbr.rel target = $region3
    $region8: #{tpu_custom_call.1} parent=1 // loop_exit
      _
    %230 = vsyncpa [#allocation3], 1
    %s231 = scalar_lea.sflag [#allocation3], 1
    %232 = vsyncpa %s231, 1

</llo_original>
